<compile_context>
chip_gen: v5e
topology: v5e:2x2
jax: 0.10.0
libtpu: 0.0.40
codegen_flags: <defaults>
</compile_context>

<pallas_src>
import functools
import math

import jax
import jax.numpy as jnp
from jax.experimental import pallas as pl
from jax.experimental.pallas import tpu as pltpu

MASK = -1.0
INF = -math.inf


def _round_up(x, m):
    return ((x + m - 1) // m) * m


def _softmax_pool_kernel(x_ref, o_ref, *, inv_temp):
    # x_ref: (TR, M) block of rows; full M so the row-wise reduction is local.
    x = x_ref[...].astype(jnp.float32)
    # sims[sims == MASK] = -inf  (mask the values themselves, like PyTorch, so
    # NaN propagation for masked entries is preserved).
    x = jnp.where(x == MASK, INF, x)
    # softmax(sims / temperature): multiply by precomputed 1/T (no f32 divide
    # on the wide M axis).
    s = x * inv_temp
    m = jnp.max(s, axis=-1, keepdims=True)
    e = jnp.exp(s - m)
    denom = jnp.sum(e, axis=-1, keepdims=True)          # (TR, 1)
    num = jnp.sum(e * x, axis=-1, keepdims=True)        # (TR, 1) fused weighted sum
    # Exact per-row normalization: only a width-1 column, so the divide is cheap
    # and keeps full f32 accuracy (the approx reciprocal caused the mismatch).
    o_ref[...] = (num / denom).astype(o_ref.dtype)


def softmax_pooling(sims, temperature=0.1, *, target_block_bytes=2 << 20):
    assert sims.ndim == 3, "SoftmaxPooling expects a 3-D input"
    B, N, M = sims.shape
    R = B * N
    x2 = sims.reshape(R, M)

    # --- choose the row tile (VMEM-budgeted, sublane-aligned) ---------------
    row_bytes = M * x2.dtype.itemsize
    tr = (target_block_bytes // max(row_bytes, 1)) // 8 * 8
    tr = max(8, min(1024, tr))
    # Never make the tile (much) larger than the row count.
    tr = min(tr, _round_up(R, 8))
    # Keep >= 2 grid steps when possible so both TensorCores get work.
    if R > 8 and tr * 2 > R:
        tr = max(8, _round_up(-(-R // 2), 8))

    # --- pad rows up to a tile multiple (never a full-array fallback) -------
    R_pad = _round_up(R, tr)
    if R_pad != R:
        # Pad rows with 0.0 (benign: finite softmax, sliced off below).
        x2 = jnp.pad(x2, ((0, R_pad - R), (0, 0)))

    grid = (R_pad // tr,)
    out2 = pl.pallas_call(
        functools.partial(_softmax_pool_kernel, inv_temp=1.0 / temperature),
        out_shape=jax.ShapeDtypeStruct((R_pad, 1), sims.dtype),
        grid=grid,
        in_specs=[pl.BlockSpec((tr, M), lambda i: (i, 0))],
        out_specs=pl.BlockSpec((tr, 1), lambda i: (i, 0)),
        compiler_params=pltpu.CompilerParams(
            dimension_semantics=("parallel",),
            vmem_limit_bytes=48 * 1024 * 1024,
        ),
    )(x2)
    return out2[:R, 0].reshape(B, N)


def softmax_pooling_ref(sims, temperature=0.1):
    x = jnp.where(sims == MASK, INF, sims)
    w = jax.nn.softmax(x / temperature, axis=-1)
    return jnp.sum(w * x, axis=-1)


if __name__ == "__main__":
    key = jax.random.PRNGKey(0)

    # Main test: shapes consistent with the module (B, N, M).
    B, N, M = 2, 16, 128
    sims = jax.random.normal(key, (B, N, M), dtype=jnp.float32)

    out = softmax_pooling(sims, temperature=0.1)
    out = jax.block_until_ready(out)
    ref = softmax_pooling_ref(sims, temperature=0.1)
    assert out.shape == (B, N)
    assert jnp.allclose(out, ref, atol=1e-3, rtol=1e-3), "mismatch vs reference"

    # Odd-shape test: exercises the row-padding path (R=15 not a multiple of 8)
    # and a non-128-multiple M (full-M block, so still valid).
    B2, N2, M2 = 3, 5, 96
    sims2 = jax.random.normal(jax.random.PRNGKey(1), (B2, N2, M2), dtype=jnp.float32)
    out2 = jax.block_until_ready(softmax_pooling(sims2, temperature=0.1))
    ref2 = softmax_pooling_ref(sims2, temperature=0.1)
    assert out2.shape == (B2, N2)
    assert jnp.allclose(out2, ref2, atol=1e-3, rtol=1e-3), "mismatch vs reference (padded)"

    print("KERNEL_OK")
</pallas_src>

<mosaic_0001>
module attributes {stable_mosaic.version = 11 : i64} {
  func.func @_softmax_pool_kernel(%arg0: i32, %arg1: memref<16x128xf32, #tpu.memory_space<vmem>>, %arg2: memref<16x1xf32, #tpu.memory_space<vmem>>) attributes {dimension_semantics = [#tpu.dimension_semantics<parallel>], iteration_bounds = array<i64: 2>, scalar_prefetch = 0 : i64, scratch_operands = 0 : i64, tpu.core_type = #tpu.core_type<tc>, window_params = [{transform_indices = @transform_0, window_bounds = array<i64: 16, 128>}, {transform_indices = @transform_1, window_bounds = array<i64: 16, 1>}]} {
    %c0 = arith.constant 0 : index
    %c0_0 = arith.constant 0 : index
    %0 = vector.load %arg1[%c0, %c0_0] : memref<16x128xf32, #tpu.memory_space<vmem>>, vector<16x128xf32>
    %cst = arith.constant -1.000000e+00 : f32
    %1 = vector.broadcast %cst : f32 to vector<16x128xf32>
    %2 = arith.cmpf oeq, %0, %1 : vector<16x128xf32>
    %cst_1 = arith.constant 0xFF800000 : f32
    %3 = vector.broadcast %cst_1 : f32 to vector<16x128xf32>
    %4 = arith.select %2, %3, %0 : vector<16x128xi1>, vector<16x128xf32>
    %cst_2 = arith.constant 1.000000e+01 : f32
    %5 = vector.broadcast %cst_2 : f32 to vector<16x128xf32>
    %6 = arith.mulf %4, %5 : vector<16x128xf32>
    %cst_3 = arith.constant dense<0xFF800000> : vector<16xf32>
    %7 = vector.multi_reduction <maximumf>, %6, %cst_3 [1] : vector<16x128xf32> to vector<16xf32>
    %8 = vector.shape_cast %7 : vector<16xf32> to vector<16x1xf32>
    %9 = vector.broadcast %8 : vector<16x1xf32> to vector<16x128xf32>
    %10 = arith.subf %6, %9 : vector<16x128xf32>
    %11 = math.exp %10 : vector<16x128xf32>
    %cst_4 = arith.constant dense<0.000000e+00> : vector<16xf32>
    %12 = vector.multi_reduction <add>, %11, %cst_4 [1] : vector<16x128xf32> to vector<16xf32>
    %13 = vector.shape_cast %12 : vector<16xf32> to vector<16x1xf32>
    %14 = arith.mulf %11, %4 : vector<16x128xf32>
    %cst_5 = arith.constant dense<0.000000e+00> : vector<16xf32>
    %15 = vector.multi_reduction <add>, %14, %cst_5 [1] : vector<16x128xf32> to vector<16xf32>
    %16 = vector.shape_cast %15 : vector<16xf32> to vector<16x1xf32>
    %17 = arith.divf %16, %13 : vector<16x1xf32>
    %c0_6 = arith.constant 0 : index
    %c0_7 = arith.constant 0 : index
    %18 = vector.load %arg2[%c0_6, %c0_7] : memref<16x1xf32, #tpu.memory_space<vmem>>, vector<16x1xf32>
    tpu.vector_store %arg2[%c0_6, %c0_7], %17 {strides = array<i32>} : memref<16x1xf32, #tpu.memory_space<vmem>>, vector<16x1xf32>,
    return
  }
  func.func @transform_0(%arg0: i32) -> (i32, i32) {
    %c0_i32 = arith.constant 0 : i32
    %c0_i32_0 = arith.constant 0 : i32
    return %arg0, %c0_i32 : i32, i32
  }
  func.func @transform_1(%arg0: i32) -> (i32, i32) {
    %c0_i32 = arith.constant 0 : i32
    %c0_i32_0 = arith.constant 0 : i32
    return %arg0, %c0_i32 : i32, i32
  }
}

</mosaic_0001>

<llo_original>
// kernel: tpu_custom_call.1
$region0: #{tpu_custom_call.1}
  #allocation0 [shape = 'u32[]', space=smem, size = 0x4, offset = 0x4, fixed_abs, tag = 'smem constant byte address 0x4 - core index']
  #allocation1 [shape = 'u32[72,128]{1,0:T(1,128)}', space=vmem, size = 0x9000, scoped, tag = 'internal scratch']
  %s0 = inlined_call_operand.hbm [shape: f32[32,128], index: 0, kind: input, shape index: {}]
  %s1 = inlined_call_operand.vmem [shape: f32[32,1], index: 1, kind: output, shape index: {}]
  %s2 = sld [smem:[#allocation0]]
  $region41: #{tpu_custom_call.1} parent=0
    _
  %s4 = ssub.s32 1, %s2
  %s5 = scalar_select 0, %s4, %s2
  $region1: #{tpu_custom_call.1} parent=0
    #allocation2 [shape = 'u8[16384]{0}', space=vmem, size = 0x4000, scoped, tag = 'input window, operand 0']
    #allocation3 [shape = 's32[2]{0}', space=sflag, size = 0x8, scoped, tag = 'scoped memory for tpu_custom_call.1']
    %6 = vsyncpa [#allocation3], 0
    %s7 = scalar_lea.sflag [#allocation3], 1
    %8 = vsyncpa %s7, 0
    loop: start=0, step=1, limit=4
    $region2: #{tpu_custom_call.1} parent=1 // loop_pre_header
      _
    $region3: #{tpu_custom_call.1} parent=1 // loop_header
      %s10 = sphi 0, %s14
      %p11 = scmp.ge.s32.totalorder %s10, 4
      %s20 = sphi 0, %s22
      %s23 = sphi 0, %s20
      %s24 = sphi 0, %s23
      %s40 = sphi 0, %s24
      %s46 = sphi 0, %s48
      %s49 = sphi 0, %s46
      %s50 = sphi 0, %s49
      %s66 = sphi 0, %s50
    $region4: #{tpu_custom_call.1} parent=1 // loop_header_branch
      %13 = sbr.rel (%p11) target = $region8
    $region5: #{tpu_custom_call.1} parent=1 // loop_body
      %s15 = ssub.s32 %s10, 1
      %s16 = ssub.s32 %s10, 2
      %s17 = sadd.s32 %s10, 1
      %s18 = ssub.s32 %s10, %s17
      %p19 = scmp.eq.s32.totalorder %s18, 0
      %s21 = sadd.s32 %s20, 1
      %s22 = scalar_select %p19, %s20, %s21
      %p25 = pneg %p19
      %p26 = scmp.eq.s32.totalorder %s10, 1
      %p27 = por %p25, %p26
      %p28 = scmp.ne.s32.totalorder %s20, %s23
      %p29 = scmp.eq.s32.totalorder %s10, 0
      %p30 = por %p28, %p29
      %p31 = scmp.ne.s32.totalorder %s20, %s23
      %p32 = scmp.eq.s32.totalorder %s15, 1
      %p33 = por %p31, %p32
      %p34 = scmp.ne.s32.totalorder %s23, %s24
      %p35 = scmp.eq.s32.totalorder %s15, 0
      %p36 = por %p34, %p35
      %p37 = scmp.ne.s32.totalorder %s23, %s24
      %p38 = scmp.eq.s32.totalorder %s16, 1
      %p39 = por %p37, %p38
      %p41 = scmp.ne.s32.totalorder %s24, %s40
      %p42 = scmp.eq.s32.totalorder %s16, 0
      %p43 = por %p41, %p42
      %s44 = ssub.s32 %s10, %s17
      %p45 = scmp.eq.s32.totalorder %s44, 0
      %s47 = sadd.s32 %s46, 1
      %s48 = scalar_select %p45, %s46, %s47
      %p51 = pneg %p45
      %p52 = scmp.eq.s32.totalorder %s10, 1
      %p53 = por %p51, %p52
      %p54 = scmp.ne.s32.totalorder %s46, %s49
      %p55 = scmp.eq.s32.totalorder %s10, 0
      %p56 = por %p54, %p55
      %p57 = scmp.ne.s32.totalorder %s46, %s49
      %p58 = scmp.eq.s32.totalorder %s15, 1
      %p59 = por %p57, %p58
      %p60 = scmp.ne.s32.totalorder %s49, %s50
      %p61 = scmp.eq.s32.totalorder %s15, 0
      %p62 = por %p60, %p61
      %p63 = scmp.ne.s32.totalorder %s49, %s50
      %p64 = scmp.eq.s32.totalorder %s16, 1
      %p65 = por %p63, %p64
      %p67 = scmp.ne.s32.totalorder %s50, %s66
      %p68 = scmp.eq.s32.totalorder %s16, 0
      %p69 = por %p67, %p68
      %p70 = scmp.le.s32.totalorder 1, %s10
      %p71 = scmp.lt.s32.totalorder %s10, 3
      %p72 = pnand %p70, %p71
      %p73 = pneg %p72
      // Predicated region
      $region9: #{tpu_custom_call.1} parent=5 // pred_check
        _
      $region10: #{tpu_custom_call.1} parent=5 // pred_check_branch
        %75 = sbr.rel (%p72) target = $region12
      $region11: #{tpu_custom_call.1} parent=5 // pred_region
        %s76 = ssub.s32 %s10, 1
      $region12: #{tpu_custom_call.1} parent=5 // pred_fallthru
        _
      %p77 = scmp.lt.s32.totalorder %s10, 2
      // Predicated region
      $region13: #{tpu_custom_call.1} parent=5 // pred_check
        %p78 = pneg %p77
      $region14: #{tpu_custom_call.1} parent=5 // pred_check_branch
        %80 = sbr.rel (%p78) target = $region16
      $region15: #{tpu_custom_call.1} parent=5 // pred_region
        // Predicated region
        $region17: #{tpu_custom_call.1} parent=15 // pred_check
          %p81 = pneg %p30
        $region18: #{tpu_custom_call.1} parent=15 // pred_check_branch
          %83 = sbr.rel (%p81) target = $region20
        $region19: #{tpu_custom_call.1} parent=15 // pred_region
          %s84 = sand.u32 %s20, 1
          %s85 = scalar_lea.sflag [#allocation3], %s84
          %s86 = sand.u32 %s20, 1
          %s87 = smul.addr %s86, 16
          %s88 = scalar_lea.vmem [#allocation2], %s87
          %s89 = smul.u32 2, %s10
          %91 = vsyncadd %s85, 0
          %s92 = smul.addr %s89, 8
          %s93 = scalar_lea.hbm %s0, %s92
          %s94 = sshll.u32 %s93, 4
          %s95 = int_to_ptr.hbm [resolvable:$true] %s94
          %s96 = sshll.u32 %s88, 4
          %s97 = int_to_ptr.vmem [resolvable:$true] %s96
          %102 = dma.hbm_to_vmem [thread:$0]  %s95, 256, %s97, %s85, 128, 128, 8
        $region20: #{tpu_custom_call.1} parent=15 // pred_fallthru
          _
      $region16: #{tpu_custom_call.1} parent=5 // pred_fallthru
        _
      %p103 = scmp.le.s32.totalorder 1, %s10
      %p104 = scmp.lt.s32.totalorder %s10, 3
      %p105 = pnand %p103, %p104
      %p106 = pneg %p105
      // Predicated region
      $region21: #{tpu_custom_call.1} parent=5 // pred_check
        _
      $region22: #{tpu_custom_call.1} parent=5 // pred_check_branch
        %108 = sbr.rel (%p105) target = $region24
      $region23: #{tpu_custom_call.1} parent=5 // pred_region
        %s109 = ssub.s32 %s10, 1
        %s110 = sand.u32 %s23, 1
        %s111 = scalar_lea.sflag [#allocation3], %s110
        %s112 = sand.u32 %s23, 1
        %s113 = smul.addr %s112, 16
        %s114 = scalar_lea.vmem [#allocation2], %s113
        // Predicated region
        $region25: #{tpu_custom_call.1} parent=23 // pred_check
          %p115 = pneg %p36
        $region26: #{tpu_custom_call.1} parent=23 // pred_check_branch
          %117 = sbr.rel (%p115) target = $region28
        $region27: #{tpu_custom_call.1} parent=23 // pred_region
          %119 = dma.done %s111, 256
        $region28: #{tpu_custom_call.1} parent=23 // pred_fallthru
          _
        %s120 = sand.u32 %s23, 1
        %s121 = scalar_lea.sflag [#allocation3], %s120
        %s122 = sand.u32 %s23, 1
        %s123 = smul.addr %s122, 16
        %s124 = scalar_lea.vmem [#allocation2], %s123
        %p125 = pneg %p36
        %p126 = pneg %p33
        %p127 = pneg %p62
        %p128 = pneg %p59
        %s129 = smul.u32 2, %s15
        %p130 = scmp.lt.s32.totalorder %s129, 3
        %s131 = scalar_select %p130, %s129, 3
        %s132 = smul.addr %s131, 8
        %s133 = scalar_lea.vmem %s1, %s132
        %s134 = smul.u32 2, %s15
        %s135 = smul.u32 2, %s15
        %p136 = scmp.lt.s32.totalorder %s135, 3
        %s137 = scalar_select %p136, %s135, 3
        %s138 = smul.addr %s137, 8
        %s139 = scalar_lea.vmem %s1, %s138
        %s140 = smul.u32 2, %s15
        %v141 = vld [vmem:[%s114] sm:$0xff]
        %v142 = vld [vmem:[%s114 + $0x8] sm:$0xff]
        %vm143 = vcmp.eq.f32.partialorder %v141, -1.0
        %vm144 = vcmp.eq.f32.partialorder %v142, -1.0
        %v145 = vsel %vm143, -inf, %v141
        %v146 = vsel %vm144, -inf, %v142
        %v147 = vmul.f32 %v145, 10.0
        %v148 = vmul.f32 %v146, 10.0
        %149 = vmax.xlane.f32.xlu0 %v147
        %v150 = vpop.xlane.xlu0 %149
        %151 = vmax.xlane.f32.xlu0 %v148
        %v152 = vpop.xlane.xlu0 %151
        %v153 = vsub.f32 %v147, %v150
        %v154 = vsub.f32 %v148, %v152
        %v155 = vmul.f32 %v153, 1.442695
        %v156 = vpow.pop %v155
        %v157 = vmul.f32 %v154, 1.442695
        %v158 = vpow.pop %v157
        %159 = vadd.xlane.f32.xlu0 %v156
        %v160 = vpop.xlane.xlu0 %159
        %161 = vadd.xlane.f32.xlu0 %v158
        %v162 = vpop.xlane.xlu0 %161
        %v163 = vmul.f32 %v156, %v145
        %v164 = vmul.f32 %v158, %v146
        %165 = vadd.xlane.f32.xlu0 %v163
        %v166 = vpop.xlane.xlu0 %165
        %167 = vadd.xlane.f32.xlu0 %v164
        %v168 = vpop.xlane.xlu0 %167
        %v169 = vrcp.pop %v160
        %v170 = vmul.f32 %v160, %v169
        %v171 = vsub.f32 1.0, %v170
        %v172 = vmul.f32 %v169, %v171
        %v173 = vadd.f32 %v169, %v172
        %vm174 = vweird.f32 %v160
        %vm175 = vweird.f32 %v169
        %vm176 = vmor %vm174, %vm175
        %v177 = vsel %vm176, %v169, %v173
        %v178 = vand.u32 2147483647, %v160
        %vm179 = vcmp.eq.f32.partialorder %v178, 8.507059e+37
        %v180 = vand.u32 %v160, 2147483648
        %v181 = vor.u32 1.1754944e-38, %v180
        %v182 = vsel %vm179, %v181, %v177
        %v183 = vmul.f32 %v166, %v182
        %v184 = vrcp.pop %v162
        %v185 = vmul.f32 %v162, %v184
        %v186 = vsub.f32 1.0, %v185
        %v187 = vmul.f32 %v184, %v186
        %v188 = vadd.f32 %v184, %v187
        %vm189 = vweird.f32 %v162
        %vm190 = vweird.f32 %v184
        %vm191 = vmor %vm189, %vm190
        %v192 = vsel %vm191, %v184, %v188
        %v193 = vand.u32 2147483647, %v162
        %vm194 = vcmp.eq.f32.partialorder %v193, 8.507059e+37
        %v195 = vand.u32 %v162, 2147483648
        %v196 = vor.u32 1.1754944e-38, %v195
        %v197 = vsel %vm194, %v196, %v192
        %v198 = vmul.f32 %v168, %v197
        %vm199 = vcmask 7168
        %200 = vst.msk [vmem:[%s139] sm:$0xff] %vm199, %v183
        %201 = vst.msk [vmem:[%s139 + $0x8] sm:$0xff] %vm199, %v198
        %s202 = smul.u32 2, %s15
        %p203 = scmp.lt.s32.totalorder %s202, 3
        %s204 = scalar_select %p203, %s202, 3
        %s205 = smul.addr %s204, 8
        %s206 = scalar_lea.vmem %s1, %s205
        // Predicated region
        $region29: #{tpu_custom_call.1} parent=23 // pred_check
          %p207 = pneg %p59
        $region30: #{tpu_custom_call.1} parent=23 // pred_check_branch
          %209 = sbr.rel (%p207) target = $region32
        $region31: #{tpu_custom_call.1} parent=23 // pred_region
          %s210 = smul.u32 2, %s15
        $region32: #{tpu_custom_call.1} parent=23 // pred_fallthru
          _
      $region24: #{tpu_custom_call.1} parent=5 // pred_fallthru
        _
      %p211 = scmp.le.s32.totalorder 2, %s10
      // Predicated region
      $region33: #{tpu_custom_call.1} parent=5 // pred_check
        %p212 = pneg %p211
      $region34: #{tpu_custom_call.1} parent=5 // pred_check_branch
        %214 = sbr.rel (%p212) target = $region36
      $region35: #{tpu_custom_call.1} parent=5 // pred_region
        %s215 = ssub.s32 %s10, 2
        // Predicated region
        $region37: #{tpu_custom_call.1} parent=35 // pred_check
          %p216 = pneg %p65
        $region38: #{tpu_custom_call.1} parent=35 // pred_check_branch
          %218 = sbr.rel (%p216) target = $region40
        $region39: #{tpu_custom_call.1} parent=35 // pred_region
          %s219 = smul.u32 2, %s16
          %p220 = scmp.lt.s32.totalorder %s219, 3
          %s221 = scalar_select %p220, %s219, 3
          %s222 = smul.addr %s221, 8
          %s223 = scalar_lea.vmem %s1, %s222
        $region40: #{tpu_custom_call.1} parent=35 // pred_fallthru
          _
      $region36: #{tpu_custom_call.1} parent=5 // pred_fallthru
        _
    $region6: #{tpu_custom_call.1} parent=1 // loop_footer
      %s14 = sadd.s32 1, %s10
    $region7: #{tpu_custom_call.1} parent=1 // loop_footer_branch
      %9 = sbr.rel target = $region3
    $region8: #{tpu_custom_call.1} parent=1 // loop_exit
      _
    %224 = vsyncpa [#allocation3], 1
    %s225 = scalar_lea.sflag [#allocation3], 1
    %226 = vsyncpa %s225, 1

</llo_original>
